<compile_context>
chip_gen: v7x
topology: tpu7x:2x2x1
jax: 0.10.0
libtpu: 0.0.40
codegen_flags: <defaults>
</compile_context>

<pallas_src>
import functools

import jax
import jax.numpy as jnp
from jax.experimental import pallas as pl
from jax.experimental.pallas import tpu as pltpu


# ---------------------------------------------------------------------------
# Per-generation limits
# ---------------------------------------------------------------------------
def _vmem_limit_bytes():
    """Scoped VMEM limit: ~100 MiB on v5e/v6e (128 MiB physical), 48 MiB else."""
    try:
        kind = jax.devices()[0].device_kind.lower()
    except Exception:  # pragma: no cover - defensive
        kind = ""
    if "v5" in kind or "v6" in kind:
        return 100 * 1024 * 1024
    return 48 * 1024 * 1024  # v7x: 64 MiB physical, 32 MiB scoped default


def _resident_budget_bytes(vmem_limit):
    """VMEM budget for the resident transformed-feature buffer."""
    return (48 if vmem_limit > 64 * 1024 * 1024 else 20) * 1024 * 1024


# ---------------------------------------------------------------------------
# Kernels
# ---------------------------------------------------------------------------
def _transform_kernel(x_ref, w_ref, o_ref):
    """One row tile of XW = X @ W (bf16 in, f32 accumulate, bf16 out)."""
    o_ref[...] = jnp.dot(
        x_ref[...], w_ref[...], preferred_element_type=jnp.float32
    ).astype(o_ref.dtype)


def _epilogue(z, activation, out_dtype):
    """Bias already added; z is f32 [tm, d_out] with lane-dense d_out."""
    if activation == "relu":
        return jnp.maximum(z, 0.0).astype(out_dtype)
    # log_softmax over the 128-padded class axis (padded cols carry -1e30 bias).
    m = jnp.max(z, axis=-1, keepdims=True)
    s = z - m
    lse = jnp.log(jnp.sum(jnp.exp(s), axis=-1, keepdims=True))
    return (s - lse).astype(out_dtype)


def _aggregate_kernel(a_ref, xw_ref, b_ref, o_ref, acc_ref, *,
                      activation, tk, xw_resident):
    """One (row tile, k tile) step of act(A_hat @ XW + b).

    If xw_resident, xw_ref holds the full [n_pad, d_out] buffer (constant
    index_map -> DMA'd once); otherwise it is the streamed [tk, d_out] block.
    """
    k = pl.program_id(1)

    @pl.when(k == 0)
    def _():
        acc_ref[...] = jnp.zeros_like(acc_ref)

    if xw_resident:
        start = pl.multiple_of(k * tk, tk)
        xw = xw_ref[pl.ds(start, tk), :]
    else:
        xw = xw_ref[...]

    acc_ref[...] += jnp.dot(a_ref[...], xw, preferred_element_type=jnp.float32)

    @pl.when(k == pl.num_programs(1) - 1)
    def _():
        o_ref[...] = _epilogue(acc_ref[...] + b_ref[...], activation, o_ref.dtype)


def _fused_aggregate_kernel(a_ref, h_ref, w_ref, b_ref, o_ref, acc_ref, *,
                            activation, tk, h_resident):
    """One (row tile, k tile) step of act(A_hat @ (H W) + b).

    The layer-2 feature transform is fused: per k step compute (H_tile @ W)
    then (A_tile @ result).  W stays resident (constant-index BlockSpec).  The
    redundant per-row-tile recompute of H_tile @ W hides under the
    memory-bound A_hat stream.
    """
    k = pl.program_id(1)

    @pl.when(k == 0)
    def _():
        acc_ref[...] = jnp.zeros_like(acc_ref)

    if h_resident:
        start = pl.multiple_of(k * tk, tk)
        h_tile = h_ref[pl.ds(start, tk), :]
    else:
        h_tile = h_ref[...]

    t = jnp.dot(
        h_tile, w_ref[...], preferred_element_type=jnp.float32
    ).astype(h_tile.dtype)  # keep both MXU dots in bf16 (matches prior xw2 cast)
    acc_ref[...] += jnp.dot(a_ref[...], t, preferred_element_type=jnp.float32)

    @pl.when(k == pl.num_programs(1) - 1)
    def _():
        o_ref[...] = _epilogue(acc_ref[...] + b_ref[...], activation, o_ref.dtype)


# ---------------------------------------------------------------------------
# pallas_call wrappers
# ---------------------------------------------------------------------------
def _transform(x, w, tm, vmem_limit):
    n_pad, f_pad = x.shape
    d_out = w.shape[1]
    return pl.pallas_call(
        _transform_kernel,
        out_shape=jax.ShapeDtypeStruct((n_pad, d_out), x.dtype),
        grid_spec=pltpu.PrefetchScalarGridSpec(
            num_scalar_prefetch=0,
            grid=(n_pad // tm,),
            in_specs=[
                pl.BlockSpec((tm, f_pad), lambda i: (i, 0)),
                pl.BlockSpec((f_pad, d_out), lambda i: (0, 0)),  # W resident
            ],
            out_specs=pl.BlockSpec((tm, d_out), lambda i: (i, 0)),
        ),
        compiler_params=pltpu.CompilerParams(
            dimension_semantics=("parallel",),
            vmem_limit_bytes=vmem_limit,
        ),
    )(x, w)


def _aggregate(a, xw, b, tm, tk, activation, out_dtype, xw_resident, vmem_limit):
    n_pad = a.shape[0]
    d_out = xw.shape[1]
    kernel = functools.partial(
        _aggregate_kernel, activation=activation, tk=tk, xw_resident=xw_resident)
    if xw_resident:
        xw_spec = pl.BlockSpec((n_pad, d_out), lambda i, k: (0, 0))
    else:
        xw_spec = pl.BlockSpec((tk, d_out), lambda i, k: (k, 0))
    return pl.pallas_call(
        kernel,
        out_shape=jax.ShapeDtypeStruct((n_pad, d_out), out_dtype),
        grid_spec=pltpu.PrefetchScalarGridSpec(
            num_scalar_prefetch=0,
            grid=(n_pad // tm, n_pad // tk),
            in_specs=[
                pl.BlockSpec((tm, tk), lambda i, k: (i, k)),
                xw_spec,
                pl.BlockSpec((1, d_out), lambda i, k: (0, 0)),
            ],
            out_specs=pl.BlockSpec((tm, d_out), lambda i, k: (i, 0)),
            scratch_shapes=[pltpu.VMEM((tm, d_out), jnp.float32)],
        ),
        compiler_params=pltpu.CompilerParams(
            dimension_semantics=("parallel", "arbitrary"),
            vmem_limit_bytes=vmem_limit,
        ),
    )(a, xw, b)


def _fused_aggregate(a, h, w, b, tm, tk, activation, out_dtype, h_resident,
                     vmem_limit):
    n_pad = a.shape[0]
    d_in = h.shape[1]
    d_out = w.shape[1]
    kernel = functools.partial(
        _fused_aggregate_kernel, activation=activation, tk=tk,
        h_resident=h_resident)
    if h_resident:
        h_spec = pl.BlockSpec((n_pad, d_in), lambda i, k: (0, 0))
    else:
        h_spec = pl.BlockSpec((tk, d_in), lambda i, k: (k, 0))
    return pl.pallas_call(
        kernel,
        out_shape=jax.ShapeDtypeStruct((n_pad, d_out), out_dtype),
        grid_spec=pltpu.PrefetchScalarGridSpec(
            num_scalar_prefetch=0,
            grid=(n_pad // tm, n_pad // tk),
            in_specs=[
                pl.BlockSpec((tm, tk), lambda i, k: (i, k)),
                h_spec,
                pl.BlockSpec((d_in, d_out), lambda i, k: (0, 0)),  # W2 resident
                pl.BlockSpec((1, d_out), lambda i, k: (0, 0)),
            ],
            out_specs=pl.BlockSpec((tm, d_out), lambda i, k: (i, 0)),
            scratch_shapes=[pltpu.VMEM((tm, d_out), jnp.float32)],
        ),
        compiler_params=pltpu.CompilerParams(
            dimension_semantics=("parallel", "arbitrary"),
            vmem_limit_bytes=vmem_limit,
        ),
    )(a, h, w, b)


# ---------------------------------------------------------------------------
# Forward pass
# ---------------------------------------------------------------------------
def _round_up(v, m):
    return (v + m - 1) // m * m


def _pad2d(x, rows, cols, fill=0.0):
    r, c = x.shape
    return jnp.pad(x, ((0, rows - r), (0, cols - c)), constant_values=fill)


def gcn_forward(a_hat, x, w1, b1, w2, b2):
    """h1 = relu(A_hat @ (X W1) + b1); out = log_softmax(A_hat @ (h1 W2) + b2)."""
    n, f = x.shape
    h = w1.shape[1]
    c = w2.shape[1]

    vmem_limit = _vmem_limit_bytes()

    # Aggregation tiles: big to amortize per-step overhead, but guaranteeing
    # >= 2 row tiles as soon as n > 512 so v7x's two TensorCores share work.
    # Tiny graphs use one tile rounded to a multiple of 16 rows (bf16 packing).
    if n <= 512:
        tm = tk = _round_up(n, 16)
    elif n <= 4096:
        tm = tk = 512
    else:
        tm = tk = 1024
    n_pad = _round_up(n, tm)          # tm == tk, so also a multiple of tk
    f_pad = _round_up(f, 128)
    h_pad = _round_up(h, 128)
    c_pad = _round_up(c, 128)

    # Transform row tile is decoupled from the aggregation tile.
    if n_pad % 1024 == 0:
        tm_t = 1024
    elif n_pad % 512 == 0:
        tm_t = 512
    else:
        tm_t = tm

    cdt = jnp.bfloat16  # HBM/MXU compute dtype; accumulation stays f32

    # Resident-feature decision: 2x accounts for default double buffering of
    # the constant-index block (it is still only DMA'd once).
    resident_budget = _resident_budget_bytes(vmem_limit)
    feats_resident = 2 * n_pad * h_pad * 2 <= resident_budget

    a_p = _pad2d(a_hat, n_pad, n_pad).astype(cdt)
    x_p = _pad2d(x, n_pad, f_pad).astype(cdt)
    w1_p = _pad2d(w1, f_pad, h_pad).astype(cdt)
    w2_p = _pad2d(w2, h_pad, c_pad).astype(cdt)
    b1_p = _pad2d(b1.reshape(1, -1).astype(jnp.float32), 1, h_pad)
    # Padded class columns get a huge negative bias so exp() of them is exactly
    # zero and the 128-lane log_softmax matches the num_classes-wide one
    # (safe because logits stay f32 through the epilogue).
    b2_p = jnp.pad(
        b2.reshape(1, -1).astype(jnp.float32),
        ((0, 0), (0, c_pad - c)),
        constant_values=-1e30,
    )

    # Layer 1: feature transform, then aggregation with fused bias + ReLU.
    xw1 = _transform(x_p, w1_p, tm_t, vmem_limit)                 # [n_pad, h_pad] bf16
    h1 = _aggregate(a_p, xw1, b1_p, tm, tk, "relu", cdt,
                    feats_resident, vmem_limit)                   # [n_pad, h_pad] bf16
    # Layer 2: feature transform fused into the aggregation (no xw2 HBM trip).
    out = _fused_aggregate(a_p, h1, w2_p, b2_p, tm, tk, "log_softmax",
                           jnp.float32, feats_resident, vmem_limit)
    return out[:n, :c]


# ---------------------------------------------------------------------------
# Graph glue (dense equivalent of PyG GCNConv's gcn_norm, add_self_loops=True)
# ---------------------------------------------------------------------------
def build_normalized_adjacency(edge_index, num_nodes):
    """edge_index: int [2, E], row 0 = source, row 1 = target."""
    src, dst = edge_index[0], edge_index[1]
    adj = jnp.zeros((num_nodes, num_nodes), jnp.float32)
    adj = adj.at[dst, src].add(1.0)                    # A[target, source] += w
    diag = jnp.arange(num_nodes)
    has_loop = adj[diag, diag] > 0
    adj = adj.at[diag, diag].add(jnp.where(has_loop, 0.0, 1.0))
    deg = jnp.sum(adj, axis=1)
    d_inv_sqrt = jnp.where(deg > 0, 1.0 / jnp.sqrt(deg), 0.0)
    return d_inv_sqrt[:, None] * adj * d_inv_sqrt[None, :]


def glorot(key, shape):
    fan_in, fan_out = shape
    limit = jnp.sqrt(6.0 / (fan_in + fan_out))
    return jax.random.uniform(key, shape, jnp.float32, -limit, limit)


# ---------------------------------------------------------------------------
if __name__ == "__main__":
    # small, deterministic problem
    num_nodes = 16
    num_features = 8
    hidden_dim = 32
    num_classes = 4

    key = jax.random.PRNGKey(0)
    k_x, k_e, k_w1, k_w2 = jax.random.split(key, 4)

    # node features (equivalent of data.x)
    x = jax.random.normal(k_x, (num_nodes, num_features), jnp.float32)

    # deterministic small graph (ring + a few chords), made undirected
    ring_src = jnp.arange(num_nodes)
    ring_dst = (ring_src + 1) % num_nodes
    extra_src = jax.random.randint(k_e, (8,), 0, num_nodes)
    extra_dst = (extra_src + 5) % num_nodes
    src = jnp.concatenate([ring_src, ring_dst, extra_src, extra_dst])
    dst = jnp.concatenate([ring_dst, ring_src, extra_dst, extra_src])
    edge_index = jnp.stack([src, dst]).astype(jnp.int32)  # [2, E]

    # deterministic GCNConv parameters (glorot weights, zero biases, as in PyG)
    w1 = glorot(k_w1, (num_features, hidden_dim))
    b1 = jnp.zeros((1, hidden_dim), jnp.float32)
    w2 = glorot(k_w2, (hidden_dim, num_classes))
    b2 = jnp.zeros((1, num_classes), jnp.float32)

    # glue: dense normalized adjacency
    a_hat = build_normalized_adjacency(edge_index, num_nodes)

    out = gcn_forward(a_hat, x, w1, b1, w2, b2)
    out = jax.block_until_ready(out)

    # --- reference 1: mirrors the kernel's bf16-input / f32-accumulate math ---
    def ref_forward_bf16(a, xx, ww1, bb1, ww2, bb2):
        bf = jnp.bfloat16
        dot = lambda p, q: jnp.dot(
            p.astype(bf), q.astype(bf), preferred_element_type=jnp.float32
        )
        xw1 = dot(xx, ww1).astype(bf)
        hh1 = jnp.maximum(dot(a, xw1) + bb1, 0.0).astype(bf)
        xw2 = dot(hh1, ww2).astype(bf)
        hh2 = dot(a, xw2) + bb2
        return jax.nn.log_softmax(hh2, axis=1)

    ref_bf = ref_forward_bf16(a_hat, x, w1, b1, w2, b2)
    assert jnp.allclose(out, ref_bf, atol=2e-2, rtol=2e-2), "mismatch vs bf16 reference"

    # --- reference 2: plain f32 semantics (loose tolerance covers bf16 error) ---
    h1_ref = jnp.maximum(a_hat @ (x @ w1) + b1, 0.0)
    h2_ref = a_hat @ (h1_ref @ w2) + b2
    ref32 = jax.nn.log_softmax(h2_ref, axis=1)
    assert jnp.allclose(out, ref32, atol=1e-1, rtol=1e-1), "mismatch vs f32 reference"

    print("KERNEL_OK")
</pallas_src>

<mosaic_0001>
module attributes {stable_mosaic.version = 11 : i64} {
  func.func @_transform_kernel(%arg0: i32, %arg1: memref<16x128xbf16, #tpu.memory_space<vmem>>, %arg2: memref<128x128xbf16, #tpu.memory_space<vmem>>, %arg3: memref<16x128xbf16, #tpu.memory_space<vmem>>) attributes {dimension_semantics = [#tpu.dimension_semantics<parallel>], iteration_bounds = array<i64: 1>, scalar_prefetch = 0 : i64, scratch_operands = 0 : i64, tpu.core_type = #tpu.core_type<tc>, window_params = [{transform_indices = @transform_0, window_bounds = array<i64: 16, 128>}, {pipeline_mode = #tpu.pipeline_mode<synchronous>, transform_indices = @transform_1, window_bounds = array<i64: 128, 128>}, {transform_indices = @transform_2, window_bounds = array<i64: 16, 128>}]} {
    %c0 = arith.constant 0 : index
    %c0_0 = arith.constant 0 : index
    %0 = vector.load %arg1[%c0, %c0_0] : memref<16x128xbf16, #tpu.memory_space<vmem>>, vector<16x128xbf16>
    %c0_1 = arith.constant 0 : index
    %c0_2 = arith.constant 0 : index
    %1 = vector.load %arg2[%c0_1, %c0_2] : memref<128x128xbf16, #tpu.memory_space<vmem>>, vector<128x128xbf16>
    %cst = arith.constant dense<0.000000e+00> : vector<16x128xf32>
    %2 = tpu.matmul %0, %1, %cst {dimension_numbers = #tpu.dot_dimension_numbers<[1], [0], [0], [1], [0, 0, 1, 1], [], []>} : vector<16x128xbf16>, vector<128x128xbf16>, vector<16x128xf32> -> vector<16x128xf32>
    %3 = arith.truncf %2 : vector<16x128xf32> to vector<16x128xbf16>
    %c0_3 = arith.constant 0 : index
    %c0_4 = arith.constant 0 : index
    %4 = vector.load %arg3[%c0_3, %c0_4] : memref<16x128xbf16, #tpu.memory_space<vmem>>, vector<16x128xbf16>
    tpu.vector_store %arg3[%c0_3, %c0_4], %3 {strides = array<i32>} : memref<16x128xbf16, #tpu.memory_space<vmem>>, vector<16x128xbf16>,
    return
  }
  func.func @transform_0(%arg0: i32) -> (i32, i32) {
    %c0_i32 = arith.constant 0 : i32
    %c0_i32_0 = arith.constant 0 : i32
    return %arg0, %c0_i32 : i32, i32
  }
  func.func @transform_1(%arg0: i32) -> (i32, i32) {
    %c0_i32 = arith.constant 0 : i32
    %c0_i32_0 = arith.constant 0 : i32
    %c0_i32_1 = arith.constant 0 : i32
    return %c0_i32, %c0_i32_0 : i32, i32
  }
  func.func @transform_2(%arg0: i32) -> (i32, i32) {
    %c0_i32 = arith.constant 0 : i32
    %c0_i32_0 = arith.constant 0 : i32
    return %arg0, %c0_i32 : i32, i32
  }
}

</mosaic_0001>

<llo_original>
// kernel: tpu_custom_call.1
$region0: #{tpu_custom_call.1}
  #allocation0 [shape = 'u32[]', space=smem, size = 0x4, offset = 0x4, fixed_abs, tag = 'smem constant byte address 0x4 - core index']
  #allocation1 [shape = 'u32[144,128]{1,0:T(1,128)}', space=vmem, size = 0x12000, scoped, tag = 'internal scratch']
  %s0 = inlined_call_operand.hbm [shape: bf16[16,128], index: 0, kind: input, shape index: {}]
  %s1 = inlined_call_operand.hbm [shape: bf16[128,128], index: 1, kind: input, shape index: {}]
  %s2 = inlined_call_operand.hbm [shape: bf16[16,128], index: 2, kind: output, shape index: {}]
  %s3 = sld [smem:[#allocation0]]
  $region26: #{tpu_custom_call.1} parent=0
    _
  %s5 = ssub.s32 1, %s3
  %s6 = scalar_select 0, %s5, %s3
  $region1: #{tpu_custom_call.1} parent=0
    #allocation2 [shape = 'u8[4096]{0}', space=vmem, size = 0x1000, scoped, tag = 'input window, operand 0, single buffered']
    #allocation3 [shape = 's32[1]{0}', space=sflag, size = 0x4, scoped, tag = 'scoped memory for tpu_custom_call.1']
    #allocation4 [shape = 's32[1]{0}', space=sflag, size = 0x4, scoped, tag = 'scoped memory for tpu_custom_call.1']
    #allocation5 [shape = 'u8[32768]{0}', space=vmem, size = 0x8000, scoped, tag = 'input window, operand 1, single buffered']
    #allocation6 [shape = 's32[1]{0}', space=sflag, size = 0x4, scoped, tag = 'scoped memory for tpu_custom_call.1']
    #allocation7 [shape = 'u8[4096]{0}', space=vmem, size = 0x1000, scoped, tag = 'output window, operand 0, single buffered']
    %7 = vsyncpa [#allocation3], 0
    %8 = vsyncpa [#allocation6], 0
    %9 = vsyncpa [#allocation4], 0
    // Predicated region
    $region2: #{tpu_custom_call.1} parent=1 // pred_check
      _
    $region3: #{tpu_custom_call.1} parent=1 // pred_check_branch
      %11 = sbr.rel (0) target = $region5
    $region4: #{tpu_custom_call.1} parent=1 // pred_region
      %s13 = ssub.s32 128, 128
      %14 = vsyncadd [#allocation3], %s13
      %s15 = sshll.u32 [#allocation2], 4
      %s16 = int_to_ptr.vmem [resolvable:$true] %s15
      %21 = dma.hbm_to_vmem [thread:$0]  %s0, 128, %s16, [#allocation3], 64, 64, 4
    $region5: #{tpu_custom_call.1} parent=1 // pred_fallthru
      _
    // Predicated region
    $region6: #{tpu_custom_call.1} parent=1 // pred_check
      _
    $region7: #{tpu_custom_call.1} parent=1 // pred_check_branch
      %23 = sbr.rel (0) target = $region9
    $region8: #{tpu_custom_call.1} parent=1 // pred_region
      %s25 = ssub.s32 1024, 1024
      %26 = vsyncadd [#allocation6], %s25
      %s27 = sshll.u32 [#allocation5], 4
      %s28 = int_to_ptr.vmem [resolvable:$true] %s27
      %33 = dma.hbm_to_vmem [thread:$0]  %s1, 1024, %s28, [#allocation6], 64, 64, 4
    $region9: #{tpu_custom_call.1} parent=1 // pred_fallthru
      _
    // Predicated region
    $region10: #{tpu_custom_call.1} parent=1 // pred_check
      _
    $region11: #{tpu_custom_call.1} parent=1 // pred_check_branch
      %35 = sbr.rel (0) target = $region13
    $region12: #{tpu_custom_call.1} parent=1 // pred_region
      %36 = dma.done [#allocation3], 128
    $region13: #{tpu_custom_call.1} parent=1 // pred_fallthru
      _
    // Predicated region
    $region14: #{tpu_custom_call.1} parent=1 // pred_check
      _
    $region15: #{tpu_custom_call.1} parent=1 // pred_check_branch
      %38 = sbr.rel (0) target = $region17
    $region16: #{tpu_custom_call.1} parent=1 // pred_region
      %39 = dma.done [#allocation6], 1024
    $region17: #{tpu_custom_call.1} parent=1 // pred_fallthru
      _
    %v41 = vld [vmem:[#allocation2] sm:$0xf]
    %v42 = vld [vmem:[#allocation2 + $0x4] sm:$0xf]
    %v43 = vld [vmem:[#allocation5] sm:$0xf]
    %v44 = vld [vmem:[#allocation5 + $0x4] sm:$0xf]
    %v45 = vld [vmem:[#allocation5 + $0x8] sm:$0xf]
    %v46 = vld [vmem:[#allocation5 + $0xc] sm:$0xf]
    %v47 = vld [vmem:[#allocation5 + $0x10] sm:$0xf]
    %v48 = vld [vmem:[#allocation5 + $0x14] sm:$0xf]
    %v49 = vld [vmem:[#allocation5 + $0x18] sm:$0xf]
    %v50 = vld [vmem:[#allocation5 + $0x1c] sm:$0xf]
    %v51 = vld [vmem:[#allocation5 + $0x20] sm:$0xf]
    %v52 = vld [vmem:[#allocation5 + $0x24] sm:$0xf]
    %v53 = vld [vmem:[#allocation5 + $0x28] sm:$0xf]
    %v54 = vld [vmem:[#allocation5 + $0x2c] sm:$0xf]
    %v55 = vld [vmem:[#allocation5 + $0x30] sm:$0xf]
    %v56 = vld [vmem:[#allocation5 + $0x34] sm:$0xf]
    %v57 = vld [vmem:[#allocation5 + $0x38] sm:$0xf]
    %v58 = vld [vmem:[#allocation5 + $0x3c] sm:$0xf]
    %v61 = vunpack.c.l.b16 %v41
    %v62 = vunpack.c.l.b16 %v42
    %v63 = vpack.c.b16 %v62, %v61
    %v81 = vunpack.c.l.b16 %v43
    %v82 = vunpack.c.l.b16 %v44
    %v83 = vunpack.c.l.b16 %v45
    %v84 = vunpack.c.l.b16 %v46
    %v85 = vunpack.c.l.b16 %v47
    %v86 = vunpack.c.l.b16 %v48
    %v87 = vunpack.c.l.b16 %v49
    %v88 = vunpack.c.l.b16 %v50
    %v89 = vunpack.c.l.b16 %v51
    %v90 = vunpack.c.l.b16 %v52
    %v91 = vunpack.c.l.b16 %v53
    %v92 = vunpack.c.l.b16 %v54
    %v93 = vunpack.c.l.b16 %v55
    %v94 = vunpack.c.l.b16 %v56
    %v95 = vunpack.c.l.b16 %v57
    %v96 = vunpack.c.l.b16 %v58
    %v97 = vpack.c.b16 %v82, %v81
    %v98 = vpack.c.b16 %v84, %v83
    %v99 = vpack.c.b16 %v86, %v85
    %v100 = vpack.c.b16 %v88, %v87
    %v101 = vpack.c.b16 %v90, %v89
    %v102 = vpack.c.b16 %v92, %v91
    %v103 = vpack.c.b16 %v94, %v93
    %v104 = vpack.c.b16 %v96, %v95
    %113 = vmatprep.subr.bf16.mxu0 0
    %114 = vmatpush1.bf16.msra.mxu0 %v97
    %115 = vmatprep.subr.bf16.mxu0 0
    %116 = vmatpush1.bf16.msra.mxu0 %v98
    %117 = vmatprep.subr.bf16.mxu0 0
    %118 = vmatpush1.bf16.msra.mxu0 %v99
    %119 = vmatprep.subr.bf16.mxu0 0
    %120 = vmatpush1.bf16.msra.mxu0 %v100
    %121 = vmatprep.subr.bf16.mxu0 0
    %122 = vmatpush1.bf16.msra.mxu0 %v101
    %123 = vmatprep.subr.bf16.mxu0 0
    %124 = vmatpush1.bf16.msra.mxu0 %v102
    %125 = vmatprep.subr.bf16.mxu0 0
    %126 = vmatpush1.bf16.msra.mxu0 %v103
    %127 = vmatprep.subr.bf16.mxu0 0
    %128 = vmatpush1.bf16.msra.mxu0 %v104
    %129 = vmatprep.subr.bf16.mxu0 0
    %130 = vmatpush1.bf16.msra.mxu0 0
    %131 = vmatprep.subr.bf16.mxu0 0
    %132 = vmatpush1.bf16.msra.mxu0 0
    %133 = vmatprep.subr.bf16.mxu0 0
    %134 = vmatpush1.bf16.msra.mxu0 0
    %135 = vmatprep.subr.bf16.mxu0 0
    %136 = vmatpush1.bf16.msra.mxu0 0
    %137 = vmatprep.subr.bf16.mxu0 0
    %138 = vmatpush1.bf16.msra.mxu0 0
    %139 = vmatprep.subr.bf16.mxu0 0
    %140 = vmatpush1.bf16.msra.mxu0 0
    %141 = vmatprep.subr.bf16.mxu0 0
    %142 = vmatpush1.bf16.msra.mxu0 0
    %143 = vmatprep.subr.bf16.mxu0 0
    %144 = vmatpush1.bf16.msra.mxu0 0
    %145 = vmatprep.mubr.bf16.mxu0 0
    %146 = vmatmul.mubr.bf16.gmra.mrb[0].mxu0 %v63
    %v147 = vpop.f32.mrb[0].mxu0
    %v148 = vadd.f32 0.0, %v147
    %v149 = vpop.f32.mrb[0].mxu0
    %v150 = vpop.f32.mrb[0].mxu0
    %v151 = vadd.f32 0.0, %v150
    %v152 = vpop.f32.mrb[0].mxu0
    %153 = vdwg.mxu0
    %v154 = vpack.c.bf16 %v151, %v148
    %v156 = vunpack.c.l.b16 %v154
    %v157 = vunpack.c.h.b16 %v154
    %v158 = vpack.c.b16 %v156, %v156
    %v159 = vpack.c.b16 %v157, %v157
    %162 = vst [vmem:[#allocation7] sm:$0xf] %v158
    %163 = vst [vmem:[#allocation7 + $0x4] sm:$0xf] %v159
    // Predicated region
    $region18: #{tpu_custom_call.1} parent=1 // pred_check
      _
    $region19: #{tpu_custom_call.1} parent=1 // pred_check_branch
      %165 = sbr.rel (0) target = $region21
    $region20: #{tpu_custom_call.1} parent=1 // pred_region
      %s167 = ssub.s32 128, 128
      %168 = vsyncadd [#allocation4], %s167
      %s169 = sshll.u32 [#allocation7], 4
      %s170 = int_to_ptr.vmem [resolvable:$true] %s169
      %175 = dma.vmem_to_hbm [thread:$0]  %s170, 128, %s2, [#allocation4], 64, 64, 4
    $region21: #{tpu_custom_call.1} parent=1 // pred_fallthru
      _
    // Predicated region
    $region22: #{tpu_custom_call.1} parent=1 // pred_check
      _
    $region23: #{tpu_custom_call.1} parent=1 // pred_check_branch
      %177 = sbr.rel (0) target = $region25
    $region24: #{tpu_custom_call.1} parent=1 // pred_region
      %178 = dma.done [#allocation4], 128
    $region25: #{tpu_custom_call.1} parent=1 // pred_fallthru
      _
    %179 = vsyncpa [#allocation3], 1
    %180 = vsyncpa [#allocation6], 1
    %181 = vsyncpa [#allocation4], 1

</llo_original>
